<compile_context>
chip_gen: v5e
topology: v5e:2x2
jax: 0.10.0
libtpu: 0.0.40
codegen_flags: <defaults>
</compile_context>

<pallas_src>
import math

import jax
import jax.numpy as jnp
from jax import lax
from jax.experimental import pallas as pl
from jax.experimental.pallas import tpu as pltpu


def _quad_kernel(r_ref, linv_ref, out_ref, acc_ref):
    """One grid step: stream one (tile_rows, n_pad) row tile of L^{-1} and accumulate
    the partial Frobenius norm sum((r @ tile.T)**2) into a vector-shaped accumulator.

      r_ref    : VMEM (bs_pad, n_pad)       residuals mu - Y_b (resident, reused)
      linv_ref : VMEM (tile_rows, n_pad)    row tile of L^{-1} (streamed, stream dtype)
      out_ref  : VMEM (1, 8, 128)           per-shard partial quad (lane-dense block)
      acc_ref  : VMEM (bs_pad, tile_rows)   running elementwise accumulator (f32)
    """
    k = pl.program_id(1)

    @pl.when(k == 0)
    def _():
        acc_ref[...] = jnp.zeros_like(acc_ref)

    # z = r @ tile.T without materializing a transpose: contract the lane dims.
    # Both operands are already in the stream dtype, so with bf16 this is a native
    # bf16 x bf16 -> f32 MXU matmul (no per-step VPU upcast).
    z = lax.dot_general(
        r_ref[...],
        linv_ref[...],
        (((1,), (1,)), ((), ())),
        preferred_element_type=jnp.float32,
    )                                   # (bs_pad, tile_rows) on the MXU
    acc_ref[...] += z * z               # elementwise, stays on the VPU

    @pl.when(k == pl.num_programs(1) - 1)
    def _():
        # One cross-lane reduction per shard, broadcast into a lane-dense (8, 128)
        # output block so the single store is unmasked.
        out_ref[...] = jnp.zeros_like(out_ref) + jnp.sum(acc_ref[...])


def _round_up(x, m):
    return ((x + m - 1) // m) * m


def _pick_tile_rows(n_rows, n_pad, itemsize, budget_bytes):
    """Largest row tile (multiple of 128 when possible, else 8) whose (tile, n_pad)
    stream buffer stays under budget_bytes, capped at what the matrix needs."""
    row_bytes = n_pad * itemsize
    max_rows = max(8, budget_bytes // row_bytes)
    align = 128 if max_rows >= 128 else 8
    max_rows = (max_rows // align) * align
    return int(min(max_rows, _round_up(n_rows, align)))


def _tpu_defaults():
    """Generation-aware (tile_budget_bytes, num_shards, vmem_capacity_bytes|None)."""
    try:
        cap = int(pltpu.get_tpu_info().vmem_capacity_bytes)
    except Exception:
        # Unknown device: conservative defaults that fit every generation.
        return 8 * 1024 * 1024, 1, None
    if cap <= 96 * 1024 * 1024:
        # v7x-class: 64 MiB VMEM per TensorCore, 2 TCs, ~3.2 TB/s HBM
        # -> mid-size tiles, shard the row-tile stream across both cores.
        return 10 * 1024 * 1024, 2, cap
    # v5e / v6e-class: 128 MiB VMEM, single TensorCore -> large tiles.
    return 20 * 1024 * 1024, 1, cap


def log_marginal_likelihood(Y, mu, K, Sigma, *, bs, tmax,
                            num_shards=None,
                            stream_dtype=jnp.bfloat16,
                            tile_budget_bytes=None):
    """Negative GP log marginal likelihood, matching LogMarginalLikelihood.forward."""
    n = mu.shape[0]
    stream_dtype = jnp.dtype(stream_dtype)

    auto_budget, auto_shards, vmem_cap = _tpu_defaults()
    if tile_budget_bytes is None:
        tile_budget_bytes = auto_budget
    if num_shards is None:
        num_shards = auto_shards

    KS = (K + Sigma).astype(jnp.float32)
    # TODO(synk): Cholesky / triangular solve are dense LAPACK-style factorizations
    # with no clean Pallas equivalent; they stay in plain-JAX glue (mirrors Chol_inv).
    L = jnp.linalg.cholesky(KS)
    # Stable log det via the Cholesky diagonal (jnp.log(det) under/overflows in f32).
    logdet = 2.0 * jnp.sum(jnp.log(jnp.diag(L)))
    # TODO(synk): for bs << n it is cheaper end-to-end to triangular-solve against r
    # directly (O(bs*n^2)) than to form L^{-1} (O(n^3)); kept explicit here so the
    # quadratic form remains a pure streamed Pallas kernel.
    L_inv = jax.scipy.linalg.solve_triangular(
        L, jnp.eye(n, dtype=jnp.float32), lower=True)

    # Residuals, one trajectory per row; hoisted out of the kernel's grid loop.
    r = (mu.reshape(1, n).astype(jnp.float32)
         - Y.reshape(bs, n).astype(jnp.float32))

    # ----- zero padding: contributes exactly 0 to the quadratic form -----
    n_pad = _round_up(n, 128)                 # lane dim of r and L^{-1}
    bs_pad = _round_up(bs, 8)                 # full sublanes for MXU LHS / z / acc
    tile_rows = _pick_tile_rows(n, n_pad, stream_dtype.itemsize, tile_budget_bytes)
    n_tiles = _round_up(-(-n // tile_rows), num_shards)   # pad, never silently reshard
    rows_pad = n_tiles * tile_rows
    kt = n_tiles // num_shards

    r_p = jnp.zeros((bs_pad, n_pad), jnp.float32).at[:bs, :n].set(r)
    r_p = r_p.astype(stream_dtype)            # one wrapper-side cast, not per-step
    linv_p = jnp.zeros((rows_pad, n_pad), jnp.float32).at[:n, :n].set(L_inv)
    linv_p = linv_p.astype(stream_dtype)      # bf16 stream halves HBM bytes

    # ----- VMEM limit derived from the real buffer sizes -----
    stream_buf = tile_rows * n_pad * stream_dtype.itemsize      # double-buffered
    r_buf = bs_pad * n_pad * stream_dtype.itemsize
    acc_buf = bs_pad * tile_rows * 4
    out_buf = 8 * 128 * 4
    # TODO(synk): the resident residual block is still double-buffered by the default
    # pipeline (2*r_buf below); single-buffering it would reclaim r_buf bytes for
    # very large bs.
    vmem_needed = 2 * stream_buf + 2 * r_buf + acc_buf + 2 * out_buf
    vmem_limit = max(int(vmem_needed * 1.5) + (4 << 20), 32 << 20)
    if vmem_cap is not None:
        vmem_limit = min(vmem_limit, int(vmem_cap * 0.9))

    out = pl.pallas_call(
        _quad_kernel,
        out_shape=jax.ShapeDtypeStruct((num_shards, 8, 128), jnp.float32),
        grid=(num_shards, kt),
        in_specs=[
            pl.BlockSpec((bs_pad, n_pad), lambda c, k: (0, 0)),     # residuals (resident)
            pl.BlockSpec((tile_rows, n_pad),
                         lambda c, k: (c * kt + k, 0)),             # streamed L^{-1} rows
        ],
        out_specs=pl.BlockSpec((1, 8, 128), lambda c, k: (c, 0, 0)),
        scratch_shapes=[pltpu.VMEM((bs_pad, tile_rows), jnp.float32)],
        compiler_params=pltpu.CompilerParams(
            # Shard row-tile groups across TensorCores (v7x megacore); the inner
            # axis carries the VMEM accumulator, so it is "arbitrary".
            dimension_semantics=("parallel", "arbitrary"),
            vmem_limit_bytes=int(vmem_limit),
        ),
        cost_estimate=pl.CostEstimate(
            flops=2 * bs_pad * rows_pad * n_pad,
            transcendentals=0,
            bytes_accessed=(rows_pad * n_pad * stream_dtype.itemsize
                            + bs_pad * n_pad * stream_dtype.itemsize
                            + num_shards * 8 * 128 * 4),
        ),
    )(r_p, linv_p)

    quad = jnp.sum(out[:, 0, 0])
    # Constant term mirrors the PyTorch module exactly: 0.5*tmax*log(2*pi)
    # (note: intentionally NOT the textbook 0.5*n*log(2*pi)).
    const = 0.5 * tmax * math.log(2.0 * math.pi)
    return quad / (2.0 * bs) + 0.5 * logdet + const


if __name__ == "__main__":
    # Small shapes consistent with the module: bs trajectories, m components, tmax steps.
    bs, m, tmax = 2, 4, 8
    n = m * tmax  # size of mu / K / Sigma

    key = jax.random.PRNGKey(0)
    k1, k2, k3 = jax.random.split(key, 3)

    mu = jax.random.normal(k1, (n,), dtype=jnp.float32)
    B = jax.random.normal(k2, (n, n), dtype=jnp.float32)
    K = B @ B.T / n + 0.5 * jnp.eye(n, dtype=jnp.float32)     # SPD covariance
    Sigma = 0.1 * jnp.eye(n, dtype=jnp.float32)               # diagonal noise
    Y = jax.random.normal(k3, (bs * n,), dtype=jnp.float32)   # flat batch of time series

    # Plain-JAX reference following the PyTorch module's math (explicit inverse).
    A_ref = jnp.linalg.inv(K + Sigma)
    rb = (jnp.tile(mu, (bs,)) - Y).reshape(bs, n)
    quad_ref = jnp.sum((rb @ A_ref) * rb)
    ref = (quad_ref / (2.0 * bs)
           + 0.5 * jnp.log(jnp.linalg.det(K + Sigma))
           + 0.5 * tmax * math.log(2.0 * math.pi))

    # f32 stream: tight check against the explicit-inverse reference.
    loss_f32 = jax.block_until_ready(
        log_marginal_likelihood(Y, mu, K, Sigma, bs=bs, tmax=tmax,
                                stream_dtype=jnp.float32))
    assert jnp.allclose(loss_f32, ref, rtol=2e-3, atol=2e-3), (loss_f32, ref)

    # bf16 stream (default fast path): looser check (bf16 quantization of r / L^{-1}).
    loss_bf16 = jax.block_until_ready(
        log_marginal_likelihood(Y, mu, K, Sigma, bs=bs, tmax=tmax))
    assert abs(float(loss_bf16) - float(ref)) <= 5e-2 * abs(float(ref)) + 5e-1, (
        loss_bf16, ref)

    print("KERNEL_OK")
</pallas_src>

<mosaic_0001>
module attributes {stable_mosaic.version = 11 : i64} {
  func.func @_quad_kernel(%arg0: i32, %arg1: i32, %arg2: memref<8x128xf32, #tpu.memory_space<vmem>>, %arg3: memref<128x128xf32, #tpu.memory_space<vmem>>, %arg4: memref<1x8x128xf32, #tpu.memory_space<vmem>>, %arg5: memref<8x128xf32, #tpu.memory_space<vmem>>) attributes {dimension_semantics = [#tpu.dimension_semantics<parallel>, #tpu.dimension_semantics<arbitrary>], iteration_bounds = array<i64: 1, 1>, scalar_prefetch = 0 : i64, scratch_operands = 1 : i64, tpu.core_type = #tpu.core_type<tc>, window_params = [{pipeline_mode = #tpu.pipeline_mode<synchronous>, transform_indices = @transform_0, window_bounds = array<i64: 8, 128>}, {transform_indices = @transform_1, window_bounds = array<i64: 128, 128>}, {transform_indices = @transform_2, window_bounds = array<i64: 1, 8, 128>}]} {
    %c0_i32 = arith.constant 0 : i32
    %0 = arith.cmpi eq, %arg1, %c0_i32 : i32
    %1 = arith.extui %0 : i1 to i32
    %c0_i32_0 = arith.constant 0 : i32
    %2 = arith.cmpi ne, %1, %c0_i32_0 : i32
    scf.if %2 {
      %cst_10 = arith.constant 0.000000e+00 : f32
      %13 = vector.broadcast %cst_10 : f32 to vector<8x128xf32>
      %c0_11 = arith.constant 0 : index
      %c0_12 = arith.constant 0 : index
      %14 = vector.load %arg5[%c0_11, %c0_12] : memref<8x128xf32, #tpu.memory_space<vmem>>, vector<8x128xf32>
      tpu.vector_store %arg5[%c0_11, %c0_12], %13 {strides = array<i32>} : memref<8x128xf32, #tpu.memory_space<vmem>>, vector<8x128xf32>,
    } else {
    }
    %c0 = arith.constant 0 : index
    %c0_1 = arith.constant 0 : index
    %3 = vector.load %arg2[%c0, %c0_1] : memref<8x128xf32, #tpu.memory_space<vmem>>, vector<8x128xf32>
    %c0_2 = arith.constant 0 : index
    %c0_3 = arith.constant 0 : index
    %4 = vector.load %arg3[%c0_2, %c0_3] : memref<128x128xf32, #tpu.memory_space<vmem>>, vector<128x128xf32>
    %cst = arith.constant dense<0.000000e+00> : vector<8x128xf32>
    %5 = tpu.matmul %3, %4, %cst {dimension_numbers = #tpu.dot_dimension_numbers<[1], [1], [0], [0], [0, 0, 1, 0], [], []>} : vector<8x128xf32>, vector<128x128xf32>, vector<8x128xf32> -> vector<8x128xf32>
    %c0_4 = arith.constant 0 : index
    %c0_5 = arith.constant 0 : index
    %6 = vector.load %arg5[%c0_4, %c0_5] : memref<8x128xf32, #tpu.memory_space<vmem>>, vector<8x128xf32>
    %7 = arith.mulf %5, %5 : vector<8x128xf32>
    %8 = arith.addf %6, %7 : vector<8x128xf32>
    %c0_6 = arith.constant 0 : index
    %c0_7 = arith.constant 0 : index
    %9 = vector.load %arg5[%c0_6, %c0_7] : memref<8x128xf32, #tpu.memory_space<vmem>>, vector<8x128xf32>
    tpu.vector_store %arg5[%c0_6, %c0_7], %8 {strides = array<i32>} : memref<8x128xf32, #tpu.memory_space<vmem>>, vector<8x128xf32>,
    %c0_i32_8 = arith.constant 0 : i32
    %10 = arith.cmpi eq, %arg1, %c0_i32_8 : i32
    %11 = arith.extui %10 : i1 to i32
    %c0_i32_9 = arith.constant 0 : i32
    %12 = arith.cmpi ne, %11, %c0_i32_9 : i32
    scf.if %12 {
      %cst_10 = arith.constant 0.000000e+00 : f32
      %13 = vector.broadcast %cst_10 : f32 to vector<1x8x128xf32>
      %c0_11 = arith.constant 0 : index
      %c0_12 = arith.constant 0 : index
      %14 = vector.load %arg5[%c0_11, %c0_12] : memref<8x128xf32, #tpu.memory_space<vmem>>, vector<8x128xf32>
      %15 = vector.shape_cast %14 : vector<8x128xf32> to vector<1x8x128xf32>
      %cst_13 = arith.constant dense<0.000000e+00> : vector<1xf32>
      %16 = vector.multi_reduction <add>, %15, %cst_13 [1, 2] : vector<1x8x128xf32> to vector<1xf32>
      %17 = vector.shape_cast %16 : vector<1xf32> to vector<1x1x1xf32>
      %18 = vector.extract %17[0, 0, 0] : f32 from vector<1x1x1xf32>
      %19 = vector.broadcast %18 : f32 to vector<1x8x128xf32>
      %20 = arith.addf %13, %19 : vector<1x8x128xf32>
      %c0_14 = arith.constant 0 : index
      %c0_15 = arith.constant 0 : index
      %c0_16 = arith.constant 0 : index
      %21 = vector.load %arg4[%c0_14, %c0_15, %c0_16] : memref<1x8x128xf32, #tpu.memory_space<vmem>>, vector<1x8x128xf32>
      tpu.vector_store %arg4[%c0_14, %c0_15, %c0_16], %20 {strides = array<i32>} : memref<1x8x128xf32, #tpu.memory_space<vmem>>, vector<1x8x128xf32>,
    } else {
    }
    return
  }
  func.func @transform_0(%arg0: i32, %arg1: i32) -> (i32, i32) {
    %c0_i32 = arith.constant 0 : i32
    %c0_i32_0 = arith.constant 0 : i32
    %c0_i32_1 = arith.constant 0 : i32
    return %c0_i32, %c0_i32_0 : i32, i32
  }
  func.func @transform_1(%arg0: i32, %arg1: i32) -> (i32, i32) {
    %c1_i32 = arith.constant 1 : i32
    %0 = arith.muli %arg0, %c1_i32 : i32
    %1 = arith.addi %0, %arg1 : i32
    %c0_i32 = arith.constant 0 : i32
    %c0_i32_0 = arith.constant 0 : i32
    return %1, %c0_i32 : i32, i32
  }
  func.func @transform_2(%arg0: i32, %arg1: i32) -> (i32, i32, i32) {
    %c0_i32 = arith.constant 0 : i32
    %c0_i32_0 = arith.constant 0 : i32
    %c0_i32_1 = arith.constant 0 : i32
    return %arg0, %c0_i32, %c0_i32_0 : i32, i32, i32
  }
}

</mosaic_0001>

<llo_original>
// kernel: tpu_custom_call.1
$region0: #{tpu_custom_call.1}
  #allocation0 [shape = 'u32[]', space=smem, size = 0x4, offset = 0x4, fixed_abs, tag = 'smem constant byte address 0x4 - core index']
  #allocation1 [shape = 'u32[72,128]{1,0:T(1,128)}', space=vmem, size = 0x9000, scoped, tag = 'internal scratch']
  #allocation2 [shape = 'f32[8,128]{1,0:T(8,128)}', space=vmem, size = 0x1000, scoped, tag = 'scratch operand']
  %s0 = inlined_call_operand.hbm [shape: f32[8,128], index: 0, kind: input, shape index: {}]
  %s1 = inlined_call_operand.hbm [shape: f32[128,128], index: 1, kind: input, shape index: {}]
  %s2 = inlined_call_operand.hbm [shape: f32[1,8,128], index: 2, kind: output, shape index: {}]
  %s3 = sld [smem:[#allocation0]]
  $region34: #{tpu_custom_call.1} parent=0
    _
  %s5 = ssub.s32 1, %s3
  %s6 = scalar_select 0, %s5, %s3
  $region1: #{tpu_custom_call.1} parent=0
    #allocation3 [shape = 'u8[4096]{0}', space=vmem, size = 0x1000, scoped, tag = 'input window, operand 0, single buffered']
    #allocation4 [shape = 's32[1]{0}', space=sflag, size = 0x4, scoped, tag = 'scoped memory for tpu_custom_call.1']
    #allocation5 [shape = 's32[1]{0}', space=sflag, size = 0x4, scoped, tag = 'scoped memory for tpu_custom_call.1']
    #allocation6 [shape = 'u8[65536]{0}', space=vmem, size = 0x10000, scoped, tag = 'input window, operand 1, single buffered']
    #allocation7 [shape = 's32[1]{0}', space=sflag, size = 0x4, scoped, tag = 'scoped memory for tpu_custom_call.1']
    #allocation8 [shape = 'u8[4096]{0}', space=vmem, size = 0x1000, scoped, tag = 'output window, operand 0, single buffered']
    %7 = vsyncpa [#allocation4], 0
    %8 = vsyncpa [#allocation7], 0
    %9 = vsyncpa [#allocation5], 0
    // Predicated region
    $region2: #{tpu_custom_call.1} parent=1 // pred_check
      _
    $region3: #{tpu_custom_call.1} parent=1 // pred_check_branch
      %11 = sbr.rel (0) target = $region5
    $region4: #{tpu_custom_call.1} parent=1 // pred_region
      %13 = vsyncadd [#allocation4], 0
      %s15 = sshll.u32 %s0, 4
      %s16 = int_to_ptr.hbm [resolvable:$true] %s15
      %s17 = sshll.u32 [#allocation3], 4
      %s18 = int_to_ptr.vmem [resolvable:$true] %s17
      %20 = dma.hbm_to_vmem [thread:$0]  %s16, 128, %s18, [#allocation4]
    $region5: #{tpu_custom_call.1} parent=1 // pred_fallthru
      _
    // Predicated region
    $region6: #{tpu_custom_call.1} parent=1 // pred_check
      _
    $region7: #{tpu_custom_call.1} parent=1 // pred_check_branch
      %22 = sbr.rel (0) target = $region9
    $region8: #{tpu_custom_call.1} parent=1 // pred_region
      %s23 = sadd.s32 0, 0
      %s24 = smul.u32 16, %s23
      %26 = vsyncadd [#allocation7], 0
      %s27 = smul.addr %s24, 8
      %s28 = scalar_lea.hbm %s1, %s27
      %s29 = sshll.u32 %s28, 4
      %s30 = int_to_ptr.hbm [resolvable:$true] %s29
      %s31 = sshll.u32 [#allocation6], 4
      %s32 = int_to_ptr.vmem [resolvable:$true] %s31
      %37 = dma.hbm_to_vmem [thread:$0]  %s30, 2048, %s32, [#allocation7], 128, 128, 8
    $region9: #{tpu_custom_call.1} parent=1 // pred_fallthru
      _
    // Predicated region
    $region10: #{tpu_custom_call.1} parent=1 // pred_check
      _
    $region11: #{tpu_custom_call.1} parent=1 // pred_check_branch
      %39 = sbr.rel (0) target = $region13
    $region12: #{tpu_custom_call.1} parent=1 // pred_region
      %41 = dma.done [#allocation4], 128
    $region13: #{tpu_custom_call.1} parent=1 // pred_fallthru
      _
    // Predicated region
    $region14: #{tpu_custom_call.1} parent=1 // pred_check
      _
    $region15: #{tpu_custom_call.1} parent=1 // pred_check_branch
      %43 = sbr.rel (0) target = $region17
    $region16: #{tpu_custom_call.1} parent=1 // pred_region
      %45 = dma.done [#allocation7], 2048
    $region17: #{tpu_custom_call.1} parent=1 // pred_fallthru
      _
    %s46 = sadd.s32 0, 0
    %s47 = smul.u32 16, %s46
    %p48 = scmp.eq.s32.totalorder 0, 0
    // Predicated region
    $region18: #{tpu_custom_call.1} parent=1 // pred_check
      %p49 = pneg %p48
    $region19: #{tpu_custom_call.1} parent=1 // pred_check_branch
      %51 = sbr.rel (%p49) target = $region21
    $region20: #{tpu_custom_call.1} parent=1 // pred_region
      %52 = vst [vmem:[#allocation2] sm:$0xff] 0.0
    $region21: #{tpu_custom_call.1} parent=1 // pred_fallthru
      _
    %v53 = vld [vmem:[#allocation3] sm:$0xff]
    %v54 = vld [vmem:[#allocation6] sm:$0xff]
    %v55 = vld [vmem:[#allocation6 + $0x8] sm:$0xff]
    %v56 = vld [vmem:[#allocation6 + $0x10] sm:$0xff]
    %v57 = vld [vmem:[#allocation6 + $0x18] sm:$0xff]
    %v58 = vld [vmem:[#allocation6 + $0x20] sm:$0xff]
    %v59 = vld [vmem:[#allocation6 + $0x28] sm:$0xff]
    %v60 = vld [vmem:[#allocation6 + $0x30] sm:$0xff]
    %v61 = vld [vmem:[#allocation6 + $0x38] sm:$0xff]
    %v62 = vld [vmem:[#allocation6 + $0x40] sm:$0xff]
    %v63 = vld [vmem:[#allocation6 + $0x48] sm:$0xff]
    %v64 = vld [vmem:[#allocation6 + $0x50] sm:$0xff]
    %v65 = vld [vmem:[#allocation6 + $0x58] sm:$0xff]
    %v66 = vld [vmem:[#allocation6 + $0x60] sm:$0xff]
    %v67 = vld [vmem:[#allocation6 + $0x68] sm:$0xff]
    %v68 = vld [vmem:[#allocation6 + $0x70] sm:$0xff]
    %v69 = vld [vmem:[#allocation6 + $0x78] sm:$0xff]
    %70 = vmatpush.xpose.msra.mxu0 %v69
    %71 = vmatpush.xpose.msra.mxu0 %v68
    %72 = vmatpush.xpose.msra.mxu0 %v67
    %73 = vmatpush.xpose.msra.mxu0 %v66
    %74 = vmatpush.xpose.msra.mxu0 %v65
    %75 = vmatpush.xpose.msra.mxu0 %v64
    %76 = vmatpush.xpose.msra.mxu0 %v63
    %77 = vmatpush.xpose.msra.mxu0 %v62
    %78 = vmatpush.xpose.msra.mxu0 %v61
    %79 = vmatpush.xpose.msra.mxu0 %v60
    %80 = vmatpush.xpose.msra.mxu0 %v59
    %81 = vmatpush.xpose.msra.mxu0 %v58
    %82 = vmatpush.xpose.msra.mxu0 %v57
    %83 = vmatpush.xpose.msra.mxu0 %v56
    %84 = vmatpush.xpose.msra.mxu0 %v55
    %85 = vmatpush.xpose.msra.mxu0 %v54
    %86 = vmatmul.f32.gmra.mxu0 %v53
    %v87 = vpop.f32.mrf.mxu0
    %v88 = vadd.f32 0.0, %v87
    %89 = vdwg.mxu0
    %v90 = vld [vmem:[#allocation2] sm:$0xff]
    %v91 = vmul.f32 %v88, %v88
    %v92 = vadd.f32 %v90, %v91
    %93 = vst [vmem:[#allocation2] sm:$0xff] %v92
    // Predicated region
    $region22: #{tpu_custom_call.1} parent=1 // pred_check
      %p94 = pneg %p48
    $region23: #{tpu_custom_call.1} parent=1 // pred_check_branch
      %96 = sbr.rel (%p94) target = $region25
    $region24: #{tpu_custom_call.1} parent=1 // pred_region
      %v97 = vld [vmem:[#allocation2] sm:$0xff]
      %98 = vadd.xlane.f32.xlu0 %v97
      %v99 = vpop.xlane.xlu0 %98
      %v100 = vrot.slane %v99, 4
      %v101 = vadd.f32 %v99, %v100
      %v102 = vrot.slane %v101, 2
      %v103 = vadd.f32 %v101, %v102
      %v104 = vrot.slane %v103, 1
      %v105 = vadd.f32 %v103, %v104
      %s106 = vtos %v105
      %v107 = vstv %s106
      %v108 = vadd.f32 %v107, 0.0
      %109 = vst [vmem:[#allocation8] sm:$0xff] %v108
    $region25: #{tpu_custom_call.1} parent=1 // pred_fallthru
      _
    // Predicated region
    $region26: #{tpu_custom_call.1} parent=1 // pred_check
      _
    $region27: #{tpu_custom_call.1} parent=1 // pred_check_branch
      %111 = sbr.rel (0) target = $region29
    $region28: #{tpu_custom_call.1} parent=1 // pred_region
      %113 = vsyncadd [#allocation5], 0
      %s115 = sshll.u32 [#allocation8], 4
      %s116 = int_to_ptr.vmem [resolvable:$true] %s115
      %s117 = sshll.u32 %s2, 4
      %s118 = int_to_ptr.hbm [resolvable:$true] %s117
      %120 = dma.vmem_to_hbm [thread:$0]  %s116, 128, %s118, [#allocation5]
    $region29: #{tpu_custom_call.1} parent=1 // pred_fallthru
      _
    // Predicated region
    $region30: #{tpu_custom_call.1} parent=1 // pred_check
      _
    $region31: #{tpu_custom_call.1} parent=1 // pred_check_branch
      %122 = sbr.rel (0) target = $region33
    $region32: #{tpu_custom_call.1} parent=1 // pred_region
      %124 = dma.done [#allocation5], 128
    $region33: #{tpu_custom_call.1} parent=1 // pred_fallthru
      _
    %125 = vsyncpa [#allocation4], 1
    %126 = vsyncpa [#allocation7], 1
    %127 = vsyncpa [#allocation5], 1

</llo_original>
